<compile_context>
chip_gen: v5e
topology: v5e:2x2
jax: 0.10.0
libtpu: 0.0.40
codegen_flags: <defaults>
</compile_context>

<pallas_src>
import jax
import jax.numpy as jnp
from jax.experimental import pallas as pl
from jax.experimental.pallas import tpu as pltpu

D = 2  # feature / hidden size fixed by the module's (2, 2) weight shapes


def _make_lstm_kernel(B, T):
    """Build the kernel for static batch B and sequence length T."""
    G = 4 * D  # fused gate width [f | i | o | g]

    def kernel(x_ref, w_ref, out_ref):
        # w_ref is the packed parameter slab, rows = [U (D) ; V (D) ; bias (1)]
        W = w_ref[...]  # (2D+1, 4D)

        # Hoist the weight-row / bias broadcasts out of the recurrence:
        # JAX does not CSE broadcast_in_dim, so doing this inside the loop
        # would re-emit B copies of each broadcast.
        u_rows = [jnp.broadcast_to(W[k:k + 1, :], (T, G)) for k in range(D)]
        v_rows = [jnp.broadcast_to(W[D + k:D + k + 1, :], (T, G)) for k in range(D)]
        bias_b = jnp.broadcast_to(W[2 * D:2 * D + 1, :], (T, G))

        # K = D = 2 contraction done on the VPU as broadcast multiply-adds.
        def mac(a, rows):                 # a: (T, D), rows[k]: (T, 4D) -> (T, 4D)
            acc = a[:, 0:1] * rows[0]
            for k in range(1, D):
                acc = acc + a[:, k:k + 1] * rows[k]
            return acc

        hs = []

        # ---- b = 0 peeled: h == c == 0, so drop the h@V MAC and the f*c term.
        z = mac(x_ref[0], u_rows) + bias_b            # (T, 4D)
        s = jax.nn.sigmoid(z[:, 0:3 * D])             # fused f|i|o sigmoid
        g = jnp.tanh(z[:, 3 * D:4 * D])
        c = s[:, D:2 * D] * g                         # c = i * g
        h = s[:, 2 * D:3 * D] * jnp.tanh(c)           # h = o * tanh(c)
        hs.append(h)

        # ---- remaining batch steps, fully unrolled, state carried in vregs.
        for b in range(1, B):
            z = mac(x_ref[b], u_rows) + mac(h, v_rows) + bias_b
            s = jax.nn.sigmoid(z[:, 0:3 * D])         # fused f|i|o sigmoid
            g = jnp.tanh(z[:, 3 * D:4 * D])
            c = s[:, 0:D] * c + s[:, D:2 * D] * g     # c = f*c + i*g
            h = s[:, 2 * D:3 * D] * jnp.tanh(c)       # h = o * tanh(c)
            hs.append(h)

        # Single store of the whole (T, B*D) output slab (one vst, not B
        # masked partial stores into the same output tile).
        out_ref[...] = jnp.concatenate(hs, axis=1)

    return kernel


def pack_lstm_params(params):
    """Fuse the 12 parameters into one (2D+1, 4D) slab: rows [U ; V ; bias].

    Called ONCE at parameter-setup time (hoisted out of the per-call path).
    """
    Uf, Vf, bf, Ui, Vi, bi, Uo, Vo, bo, Ug, Vg, bg = params
    U = jnp.concatenate([Uf, Ui, Uo, Ug], axis=1)      # (D, 4D)
    V = jnp.concatenate([Vf, Vi, Vo, Vg], axis=1)      # (D, 4D)
    b = jnp.concatenate([bf, bi, bo, bg], axis=1)      # (1, 4D)
    return jnp.concatenate([U, V, b], axis=0)          # (2D+1, 4D)


def lstm_net_forward(x, packed_w):
    """x: (B, T, D) float32, packed_w: (2D+1, 4D).

    Returns (T, B, D) == torch.stack(output_seq, dim=1).
    """
    B, T, D_ = x.shape
    assert D_ == D

    out_flat = pl.pallas_call(
        _make_lstm_kernel(B, T),
        out_shape=jax.ShapeDtypeStruct((T, B * D), jnp.float32),
        # Grid-less call: whole arrays land in VMEM once, no pipeline overhead.
        in_specs=[
            pl.BlockSpec(memory_space=pltpu.MemorySpace.VMEM),  # x (B, T, D)
            pl.BlockSpec(memory_space=pltpu.MemorySpace.VMEM),  # packed params
        ],
        out_specs=pl.BlockSpec(memory_space=pltpu.MemorySpace.VMEM),
    )(x, packed_w)

    # (T, B*D) -> (T, B, D): contiguous reshape, no transpose / data movement.
    return out_flat.reshape(T, B, D)


def lstm_net_reference(x, params):
    """Pure-JAX mirror of the PyTorch forward for verification."""
    Uf, Vf, bf, Ui, Vi, bi, Uo, Vo, bo, Ug, Vg, bg = params
    h = jnp.zeros((1, D), jnp.float32)
    c = jnp.zeros((1, D), jnp.float32)
    outs = []
    for x_t in x:  # iterate over dim 0 (batch), exactly as the PyTorch code does
        f = jax.nn.sigmoid(x_t @ Uf + h @ Vf + bf)
        i = jax.nn.sigmoid(x_t @ Ui + h @ Vi + bi)
        o = jax.nn.sigmoid(x_t @ Uo + h @ Vo + bo)
        g = jnp.tanh(x_t @ Ug + h @ Vg + bg)
        c = f * c + i * g
        h = o * jnp.tanh(c)
        outs.append(h)
    return jnp.stack(outs, axis=1)  # (T, B, D)


if __name__ == "__main__":
    key = jax.random.PRNGKey(0)
    keys = jax.random.split(key, 13)

    # nn.init.uniform_(param, -0.1, 0.1) for the 12 parameters (deterministic here)
    shapes = [(D, D), (D, D), (1, D)] * 4  # U_f,V_f,b_f, U_i,V_i,b_i, U_o,V_o,b_o, U_g,V_g,b_g
    params = [jax.random.uniform(k, s, jnp.float32, minval=-0.1, maxval=0.1)
              for k, s in zip(keys[:12], shapes)]

    # Pack the parameters once (hoisted out of the forward call path).
    packed_w = jax.block_until_ready(pack_lstm_params(params))

    # Small input consistent with the module: (B, T, D) = (2, 5, 2)
    x = jax.random.uniform(keys[12], (2, 5, 2), jnp.float32)

    out = lstm_net_forward(x, packed_w)
    out = jax.block_until_ready(out)

    ref = lstm_net_reference(x, params)
    assert out.shape == ref.shape == (5, 2, 2)
    assert jnp.allclose(out, ref, atol=1e-5, rtol=1e-5)

    print("KERNEL_OK")
</pallas_src>

<mosaic_0001>
module attributes {stable_mosaic.version = 11 : i64} {
  func.func @kernel(%arg0: memref<2x5x2xf32, #tpu.memory_space<vmem>>, %arg1: memref<5x8xf32, #tpu.memory_space<vmem>>, %arg2: memref<5x4xf32, #tpu.memory_space<vmem>>) attributes {dimension_semantics = [], scalar_prefetch = 0 : i64, scratch_operands = 0 : i64, tpu.core_type = #tpu.core_type<tc>} {
    %c0 = arith.constant 0 : index
    %c0_0 = arith.constant 0 : index
    %0 = vector.load %arg1[%c0, %c0_0] : memref<5x8xf32, #tpu.memory_space<vmem>>, vector<5x8xf32>
    %1 = vector.extract_strided_slice %0 {offsets = [0, 0], sizes = [1, 8], strides = [1, 1]} : vector<5x8xf32> to vector<1x8xf32>
    %2 = vector.shape_cast %1 : vector<1x8xf32> to vector<1x8xf32>
    %3 = vector.broadcast %2 : vector<1x8xf32> to vector<5x8xf32>
    %4 = vector.extract_strided_slice %0 {offsets = [1, 0], sizes = [1, 8], strides = [1, 1]} : vector<5x8xf32> to vector<1x8xf32>
    %5 = vector.shape_cast %4 : vector<1x8xf32> to vector<1x8xf32>
    %6 = vector.broadcast %5 : vector<1x8xf32> to vector<5x8xf32>
    %7 = vector.extract_strided_slice %0 {offsets = [2, 0], sizes = [1, 8], strides = [1, 1]} : vector<5x8xf32> to vector<1x8xf32>
    %8 = vector.shape_cast %7 : vector<1x8xf32> to vector<1x8xf32>
    %9 = vector.broadcast %8 : vector<1x8xf32> to vector<5x8xf32>
    %10 = vector.extract_strided_slice %0 {offsets = [3, 0], sizes = [1, 8], strides = [1, 1]} : vector<5x8xf32> to vector<1x8xf32>
    %11 = vector.shape_cast %10 : vector<1x8xf32> to vector<1x8xf32>
    %12 = vector.broadcast %11 : vector<1x8xf32> to vector<5x8xf32>
    %13 = vector.extract_strided_slice %0 {offsets = [4, 0], sizes = [1, 8], strides = [1, 1]} : vector<5x8xf32> to vector<1x8xf32>
    %14 = vector.shape_cast %13 : vector<1x8xf32> to vector<1x8xf32>
    %15 = vector.broadcast %14 : vector<1x8xf32> to vector<5x8xf32>
    %c0_1 = arith.constant 0 : index
    %c0_2 = arith.constant 0 : index
    %c0_3 = arith.constant 0 : index
    %16 = vector.load %arg0[%c0_1, %c0_2, %c0_3] : memref<2x5x2xf32, #tpu.memory_space<vmem>>, vector<1x5x2xf32>
    %17 = vector.shape_cast %16 : vector<1x5x2xf32> to vector<5x2xf32>
    %18 = vector.extract_strided_slice %17 {offsets = [0, 0], sizes = [5, 1], strides = [1, 1]} : vector<5x2xf32> to vector<5x1xf32>
    %19 = vector.broadcast %18 : vector<5x1xf32> to vector<5x8xf32>
    %20 = arith.mulf %19, %3 : vector<5x8xf32>
    %21 = vector.extract_strided_slice %17 {offsets = [0, 1], sizes = [5, 1], strides = [1, 1]} : vector<5x2xf32> to vector<5x1xf32>
    %22 = vector.broadcast %21 : vector<5x1xf32> to vector<5x8xf32>
    %23 = arith.mulf %22, %6 : vector<5x8xf32>
    %24 = arith.addf %20, %23 : vector<5x8xf32>
    %25 = arith.addf %24, %15 : vector<5x8xf32>
    %26 = vector.extract_strided_slice %25 {offsets = [0, 0], sizes = [5, 6], strides = [1, 1]} : vector<5x8xf32> to vector<5x6xf32>
    %27 = arith.negf %26 : vector<5x6xf32>
    %28 = math.exp %27 : vector<5x6xf32>
    %cst = arith.constant 1.000000e+00 : f32
    %29 = vector.broadcast %cst : f32 to vector<5x6xf32>
    %30 = arith.addf %29, %28 : vector<5x6xf32>
    %31 = arith.divf %29, %30 : vector<5x6xf32>
    %32 = vector.extract_strided_slice %25 {offsets = [0, 6], sizes = [5, 2], strides = [1, 1]} : vector<5x8xf32> to vector<5x2xf32>
    %33 = math.tanh %32 : vector<5x2xf32>
    %34 = vector.extract_strided_slice %31 {offsets = [0, 2], sizes = [5, 2], strides = [1, 1]} : vector<5x6xf32> to vector<5x2xf32>
    %35 = arith.mulf %34, %33 : vector<5x2xf32>
    %36 = vector.extract_strided_slice %31 {offsets = [0, 4], sizes = [5, 2], strides = [1, 1]} : vector<5x6xf32> to vector<5x2xf32>
    %37 = math.tanh %35 : vector<5x2xf32>
    %38 = arith.mulf %36, %37 : vector<5x2xf32>
    %c1 = arith.constant 1 : index
    %c0_4 = arith.constant 0 : index
    %c0_5 = arith.constant 0 : index
    %39 = vector.load %arg0[%c1, %c0_4, %c0_5] : memref<2x5x2xf32, #tpu.memory_space<vmem>>, vector<1x5x2xf32>
    %40 = vector.shape_cast %39 : vector<1x5x2xf32> to vector<5x2xf32>
    %41 = vector.extract_strided_slice %40 {offsets = [0, 0], sizes = [5, 1], strides = [1, 1]} : vector<5x2xf32> to vector<5x1xf32>
    %42 = vector.broadcast %41 : vector<5x1xf32> to vector<5x8xf32>
    %43 = arith.mulf %42, %3 : vector<5x8xf32>
    %44 = vector.extract_strided_slice %40 {offsets = [0, 1], sizes = [5, 1], strides = [1, 1]} : vector<5x2xf32> to vector<5x1xf32>
    %45 = vector.broadcast %44 : vector<5x1xf32> to vector<5x8xf32>
    %46 = arith.mulf %45, %6 : vector<5x8xf32>
    %47 = arith.addf %43, %46 : vector<5x8xf32>
    %48 = vector.extract_strided_slice %38 {offsets = [0, 0], sizes = [5, 1], strides = [1, 1]} : vector<5x2xf32> to vector<5x1xf32>
    %49 = vector.broadcast %48 : vector<5x1xf32> to vector<5x8xf32>
    %50 = arith.mulf %49, %9 : vector<5x8xf32>
    %51 = vector.extract_strided_slice %38 {offsets = [0, 1], sizes = [5, 1], strides = [1, 1]} : vector<5x2xf32> to vector<5x1xf32>
    %52 = vector.broadcast %51 : vector<5x1xf32> to vector<5x8xf32>
    %53 = arith.mulf %52, %12 : vector<5x8xf32>
    %54 = arith.addf %50, %53 : vector<5x8xf32>
    %55 = arith.addf %47, %54 : vector<5x8xf32>
    %56 = arith.addf %55, %15 : vector<5x8xf32>
    %57 = vector.extract_strided_slice %56 {offsets = [0, 0], sizes = [5, 6], strides = [1, 1]} : vector<5x8xf32> to vector<5x6xf32>
    %58 = arith.negf %57 : vector<5x6xf32>
    %59 = math.exp %58 : vector<5x6xf32>
    %cst_6 = arith.constant 1.000000e+00 : f32
    %60 = vector.broadcast %cst_6 : f32 to vector<5x6xf32>
    %61 = arith.addf %60, %59 : vector<5x6xf32>
    %62 = arith.divf %60, %61 : vector<5x6xf32>
    %63 = vector.extract_strided_slice %56 {offsets = [0, 6], sizes = [5, 2], strides = [1, 1]} : vector<5x8xf32> to vector<5x2xf32>
    %64 = math.tanh %63 : vector<5x2xf32>
    %65 = vector.extract_strided_slice %62 {offsets = [0, 0], sizes = [5, 2], strides = [1, 1]} : vector<5x6xf32> to vector<5x2xf32>
    %66 = arith.mulf %65, %35 : vector<5x2xf32>
    %67 = vector.extract_strided_slice %62 {offsets = [0, 2], sizes = [5, 2], strides = [1, 1]} : vector<5x6xf32> to vector<5x2xf32>
    %68 = arith.mulf %67, %64 : vector<5x2xf32>
    %69 = arith.addf %66, %68 : vector<5x2xf32>
    %70 = vector.extract_strided_slice %62 {offsets = [0, 4], sizes = [5, 2], strides = [1, 1]} : vector<5x6xf32> to vector<5x2xf32>
    %71 = math.tanh %69 : vector<5x2xf32>
    %72 = arith.mulf %70, %71 : vector<5x2xf32>
    %73 = tpu.concatenate %38, %72 in 1 : vector<5x2xf32>, vector<5x2xf32> -> vector<5x4xf32>
    %c0_7 = arith.constant 0 : index
    %c0_8 = arith.constant 0 : index
    %74 = vector.load %arg2[%c0_7, %c0_8] : memref<5x4xf32, #tpu.memory_space<vmem>>, vector<5x4xf32>
    tpu.vector_store %arg2[%c0_7, %c0_8], %73 {strides = array<i32>} : memref<5x4xf32, #tpu.memory_space<vmem>>, vector<5x4xf32>,
    return
  }
}

</mosaic_0001>

<llo_original>
// kernel: tpu_custom_call.1
$region0: #{tpu_custom_call.1}
  #allocation0 [shape = 'u32[]', space=smem, size = 0x4, offset = 0x4, fixed_abs, tag = 'smem constant byte address 0x4 - core index']
  #allocation1 [shape = 'u32[72,128]{1,0:T(1,128)}', space=vmem, size = 0x9000, scoped, tag = 'internal scratch']
  %s0 = inlined_call_operand.vmem [shape: f32[2,5,2], index: 0, kind: input, shape index: {}]
  %s1 = inlined_call_operand.vmem [shape: f32[5,8], index: 1, kind: input, shape index: {}]
  %s2 = inlined_call_operand.vmem [shape: f32[5,4], index: 2, kind: output, shape index: {}]
  %s3 = sld [smem:[#allocation0]]
  $region18: #{tpu_custom_call.1} parent=0
    _
  %s5 = ssub.s32 1, %s3
  %s6 = scalar_select 0, %s5, %s3
  // Predicated region
  $region2: #{tpu_custom_call.1} parent=0 // pred_check
    _
  $region3: #{tpu_custom_call.1} parent=0 // pred_check_branch
    %8 = sbr.rel (0) target = $region5
  $region4: #{tpu_custom_call.1} parent=0 // pred_region
    _
  $region5: #{tpu_custom_call.1} parent=0 // pred_fallthru
    _
  // Predicated region
  $region6: #{tpu_custom_call.1} parent=0 // pred_check
    _
  $region7: #{tpu_custom_call.1} parent=0 // pred_check_branch
    %10 = sbr.rel (0) target = $region9
  $region8: #{tpu_custom_call.1} parent=0 // pred_region
    _
  $region9: #{tpu_custom_call.1} parent=0 // pred_fallthru
    _
  %v11 = vld [vmem:[%s1] sm:$0x1f]
  %v12 = vperm.slane %v11, 0
  %v13 = vperm.slane %v11, 1
  %v14 = vperm.slane %v11, 2
  %v15 = vperm.slane %v11, 3
  %v16 = vperm.slane %v11, 4
  %v17 = vld [vmem:[%s0] sm:$0x1f]
  %19 = vset.pattern.permute.xlu0 0
  %20 = vperm.xlu0 %19, %v17
  %v21 = vpop.permute.xlu0 %20
  %v23 = vmul.f32 %v21, %v12
  %24 = vset.pattern.permute.xlu0 1
  %25 = vperm.xlu0 %24, %v17
  %v26 = vpop.permute.xlu0 %25
  %v28 = vmul.f32 %v26, %v13
  %v29 = vadd.f32 %v23, %v28
  %v30 = vadd.f32 %v29, %v16
  %v31 = vxor.u32 %v30, 2147483648
  %v32 = vmul.f32 %v31, 1.442695
  %v33 = vpow.pop %v32
  %v34 = vadd.f32 %v33, 1.0
  %v35 = vrcp.pop %v34
  %v36 = vmul.f32 %v34, %v35
  %v37 = vsub.f32 1.0, %v36
  %v38 = vmul.f32 %v35, %v37
  %v39 = vadd.f32 %v35, %v38
  %vm40 = vweird.f32 %v34
  %vm41 = vweird.f32 %v35
  %vm42 = vmor %vm40, %vm41
  %v43 = vsel %vm42, %v35, %v39
  %v44 = vand.u32 2147483647, %v34
  %vm45 = vcmp.eq.f32.partialorder %v44, 8.507059e+37
  %v46 = vand.u32 %v34, 2147483648
  %v47 = vor.u32 1.1754944e-38, %v46
  %v48 = vsel %vm45, %v47, %v43
  %v49 = vmul.f32 1.0, %v48
  %v50 = vtanh.pop %v30
  %52 = vrot.lane.b32.xlu0 %v50, 124
  %v53 = vpop.permute.xlu0 %52
  %v55 = vmul.f32 %v49, %v53
  %v56 = vtanh.pop %v55
  %58 = vrot.lane.b32.xlu0 %v56, 2
  %v59 = vpop.permute.xlu0 %58
  %v61 = vmul.f32 %v49, %v59
  %s62 = scalar_lea.vmem %s0, 8
  %v63 = vld [vmem:[%s62] sm:$0x1f]
  %65 = vset.pattern.permute.xlu0 0
  %66 = vperm.xlu0 %65, %v63
  %v67 = vpop.permute.xlu0 %66
  %v69 = vmul.f32 %v67, %v12
  %70 = vset.pattern.permute.xlu0 1
  %71 = vperm.xlu0 %70, %v63
  %v72 = vpop.permute.xlu0 %71
  %v74 = vmul.f32 %v72, %v13
  %v75 = vadd.f32 %v69, %v74
  %77 = vset.pattern.permute.xlu0 4
  %78 = vperm.xlu0 %77, %v61
  %v79 = vpop.permute.xlu0 %78
  %v81 = vmul.f32 %v79, %v14
  %82 = vset.pattern.permute.xlu0 5
  %83 = vperm.xlu0 %82, %v61
  %v84 = vpop.permute.xlu0 %83
  %v86 = vmul.f32 %v84, %v15
  %v87 = vadd.f32 %v81, %v86
  %v88 = vadd.f32 %v75, %v87
  %v89 = vadd.f32 %v88, %v16
  %v90 = vxor.u32 %v89, 2147483648
  %v91 = vmul.f32 %v90, 1.442695
  %v92 = vpow.pop %v91
  %v93 = vadd.f32 %v92, 1.0
  %v94 = vrcp.pop %v93
  %v95 = vmul.f32 %v93, %v94
  %v96 = vsub.f32 1.0, %v95
  %v97 = vmul.f32 %v94, %v96
  %v98 = vadd.f32 %v94, %v97
  %vm99 = vweird.f32 %v93
  %vm100 = vweird.f32 %v94
  %vm101 = vmor %vm99, %vm100
  %v102 = vsel %vm101, %v94, %v98
  %v103 = vand.u32 2147483647, %v93
  %vm104 = vcmp.eq.f32.partialorder %v103, 8.507059e+37
  %v105 = vand.u32 %v93, 2147483648
  %v106 = vor.u32 1.1754944e-38, %v105
  %v107 = vsel %vm104, %v106, %v102
  %v108 = vmul.f32 1.0, %v107
  %v109 = vtanh.pop %v89
  %111 = vrot.lane.b32.xlu0 %v55, 126
  %v112 = vpop.permute.xlu0 %111
  %v114 = vmul.f32 %v108, %v112
  %116 = vrot.lane.b32.xlu0 %v109, 124
  %v117 = vpop.permute.xlu0 %116
  %v119 = vmul.f32 %v108, %v117
  %121 = vrot.lane.b32.xlu0 %v119, 126
  %v122 = vpop.permute.xlu0 %121
  %v124 = vadd.f32 %v114, %v122
  %v125 = vtanh.pop %v124
  %127 = vrot.lane.b32.xlu0 %v125, 4
  %v128 = vpop.permute.xlu0 %127
  %v130 = vmul.f32 %v108, %v128
  %131 = vrot.lane.b32.xlu0 %v61, 124
  %v132 = vpop.permute.xlu0 %131
  %135 = vrot.lane.b32.xlu0 %v130, 126
  %v136 = vpop.permute.xlu0 %135
  %vm138 = vcmask 15360
  %v139 = vsel %vm138, %v132, %v136
  %vm140 = vcmask 28672
  %141 = vst.msk [vmem:[%s2] sm:$0x1f] %vm140, %v139
  // Predicated region
  $region10: #{tpu_custom_call.1} parent=0 // pred_check
    _
  $region11: #{tpu_custom_call.1} parent=0 // pred_check_branch
    %143 = sbr.rel (0) target = $region13
  $region12: #{tpu_custom_call.1} parent=0 // pred_region
    _
  $region13: #{tpu_custom_call.1} parent=0 // pred_fallthru
    _
  // Predicated region
  $region14: #{tpu_custom_call.1} parent=0 // pred_check
    _
  $region15: #{tpu_custom_call.1} parent=0 // pred_check_branch
    %145 = sbr.rel (0) target = $region17
  $region16: #{tpu_custom_call.1} parent=0 // pred_region
    _
  $region17: #{tpu_custom_call.1} parent=0 // pred_fallthru
    _

</llo_original>
